<compile_context>
chip_gen: v7x
topology: tpu7x:2x2x1
jax: 0.10.0
libtpu: 0.0.40
codegen_flags: <defaults>
</compile_context>

<pallas_src>
import functools

import jax
import jax.numpy as jnp
from jax.experimental import pallas as pl
from jax.experimental.pallas import tpu as pltpu


_HAS_BUFFERED = hasattr(pl, "Buffered")


# ----------------------------------------------------------------------------
# Helpers
# ----------------------------------------------------------------------------
def _round_up(n, m):
    return ((n + m - 1) // m) * m


def _sublane(itemsize):
    # Native sublane tile: 8 rows for 32-bit, 16 for bf16, 32 for int8/fp8.
    return max(8, 32 // max(int(itemsize), 1))


def _weight_buffer_count():
    return 1 if _HAS_BUFFERED else 2


@functools.lru_cache(maxsize=1)
def _vmem_budget():
    cap = 128 << 20
    try:
        info = pltpu.get_tpu_info()
        cap = int(getattr(info, "vmem_capacity_bytes", cap))
    except Exception:
        pass
    # Leave headroom for Mosaic internal scratch; never assume >100 MiB scoped.
    return int(min(cap - (12 << 20), 100 << 20))


def _footprint_bytes(bb, D, H, L, itemsize, weight_buffers):
    # Weights (single- or double-buffered depending on pipeline_mode support).
    weight_elems = 2 * D * H + 2 * H * (2 * L) + (2 * L) * H + H * D
    weights = weight_buffers * weight_elems * itemsize
    # Double-buffered activation tiles (tg, bg, eps in; recon, latents out).
    io = 2 * bb * (2 * D + 3 * L + 3 * D + 9 * L) * itemsize
    # In-kernel f32 intermediates: 6 hiddens (bb,H), 3 heads (bb,2L),
    # 9 latents (bb,L), 3 reconstructions (bb,D).
    scratch = bb * (6 * H + 6 * L + 9 * L + 3 * D) * 4
    return weights + io + scratch + (4 << 20)


def _choose_block_b(B, D, H, L, itemsize, requested, budget):
    sub = _sublane(itemsize)
    # Aim for >=2 grid steps when B allows it so the "parallel" batch axis can
    # shard across both v7x TensorCores.
    half = -(-B // 2)
    bb = max(sub, min(_round_up(requested, sub), _round_up(half, sub)))
    wb = _weight_buffer_count()
    while bb > sub and _footprint_bytes(bb, D, H, L, itemsize, wb) > budget:
        bb = max(sub, _round_up(bb // 2, sub))
    return bb


def _weight_spec(shape):
    # Grid-invariant weight block: single-buffer it when the API allows.
    if _HAS_BUFFERED:
        try:
            return pl.BlockSpec(shape, lambda i: (0, 0),
                                pipeline_mode=pl.Buffered(1))
        except TypeError:
            pass
    return pl.BlockSpec(shape, lambda i: (0, 0))


# ----------------------------------------------------------------------------
# Fused ContrastiveVAE forward kernel
# ----------------------------------------------------------------------------
def _cvae_fused_kernel(tg_ref, bg_ref, eps_ref,
                       zw_in_ref, zw_h_ref, sw_in_ref, sw_h_ref,
                       dw1z_ref, dw1s_ref, dw2_ref,
                       recon_ref, lat_ref):
    f32 = jnp.float32
    L = dw1z_ref.shape[0]

    tg = tg_ref[...]
    bg = bg_ref[...]
    zw_in = zw_in_ref[...]
    zw_h = zw_h_ref[...]
    sw_in = sw_in_ref[...]
    sw_h = sw_h_ref[...]

    # ---- Encoders: native-dtype operands straight to the MXU, f32 accum. ----
    h_ztg = jnp.maximum(jnp.dot(tg, zw_in, preferred_element_type=f32), 0.0)
    h_zbg = jnp.maximum(jnp.dot(bg, zw_in, preferred_element_type=f32), 0.0)
    h_stg = jnp.maximum(jnp.dot(tg, sw_in, preferred_element_type=f32), 0.0)

    heads_ztg = jnp.dot(h_ztg.astype(zw_h.dtype), zw_h, preferred_element_type=f32)
    heads_zbg = jnp.dot(h_zbg.astype(zw_h.dtype), zw_h, preferred_element_type=f32)
    heads_stg = jnp.dot(h_stg.astype(sw_h.dtype), sw_h, preferred_element_type=f32)

    # ---- Reparametrization in f32 (v5e has no bf16 VPU/EUP). ----
    eps = eps_ref[...].astype(f32)

    def reparam(heads, e):
        m = heads[:, :L]
        lv = heads[:, L:]
        z = m + e * jnp.exp(0.5 * lv)
        return z, m, lv

    tg_z, tg_z_m, tg_z_lv = reparam(heads_ztg, eps[:, 0 * L:1 * L])
    tg_s, tg_s_m, tg_s_lv = reparam(heads_stg, eps[:, 1 * L:2 * L])
    bg_z, bg_z_m, bg_z_lv = reparam(heads_zbg, eps[:, 2 * L:3 * L])

    # ---- Decoder: zero-blocks folded away via the split first-layer weight.
    dw1z = dw1z_ref[...]
    dw1s = dw1s_ref[...]
    dw2 = dw2_ref[...]
    dd = dw1z.dtype

    a_tgz = jnp.dot(tg_z.astype(dd), dw1z, preferred_element_type=f32)
    a_tgs = jnp.dot(tg_s.astype(dd), dw1s, preferred_element_type=f32)
    a_bgz = jnp.dot(bg_z.astype(dd), dw1z, preferred_element_type=f32)

    h_tg = jnp.maximum(a_tgz + a_tgs, 0.0)   # decoder(concat([tg_z, tg_s]))
    h_bg = jnp.maximum(a_bgz, 0.0)           # decoder(concat([bg_z, 0]))
    h_fg = jnp.maximum(a_tgs, 0.0)           # decoder(concat([0, tg_s]))

    d2 = dw2.dtype
    out_tg = jnp.dot(h_tg.astype(d2), dw2, preferred_element_type=f32)
    out_bg = jnp.dot(h_bg.astype(d2), dw2, preferred_element_type=f32)
    out_fg = jnp.dot(h_fg.astype(d2), dw2, preferred_element_type=f32)

    # ---- Two lane-dense output slabs. ----
    recon_ref[...] = jnp.concatenate(
        [out_tg, out_bg, out_fg], axis=-1).astype(recon_ref.dtype)
    lat_ref[...] = jnp.concatenate(
        [tg_z, tg_z_m, tg_z_lv, tg_s, tg_s_m, tg_s_lv, bg_z, bg_z_m, bg_z_lv],
        axis=-1).astype(lat_ref.dtype)


# ----------------------------------------------------------------------------
# Wrapper
# ----------------------------------------------------------------------------
@functools.partial(jax.jit, static_argnames=("block_b", "vmem_limit"))
def _forward_impl(tg, bg, eps, params, *, block_b, vmem_limit):
    B, D = tg.shape
    H = params["z_w_in"].shape[1]
    L = params["d_w1_z"].shape[0]
    dt = tg.dtype
    bb = block_b

    def row_spec(width):
        return pl.BlockSpec((bb, width), lambda i: (i, 0))

    recon, lat = pl.pallas_call(
        _cvae_fused_kernel,
        out_shape=(jax.ShapeDtypeStruct((B, 3 * D), dt),
                   jax.ShapeDtypeStruct((B, 9 * L), dt)),
        grid_spec=pltpu.PrefetchScalarGridSpec(
            num_scalar_prefetch=0,
            grid=(pl.cdiv(B, bb),),
            in_specs=[
                row_spec(D),              # tg
                row_spec(D),              # bg
                row_spec(3 * L),          # eps packed [tg_z | tg_s | bg_z]
                _weight_spec((D, H)),     # z_w_in
                _weight_spec((H, 2 * L)), # z_w_heads (mean | logvar)
                _weight_spec((D, H)),     # s_w_in
                _weight_spec((H, 2 * L)), # s_w_heads
                _weight_spec((L, H)),     # d_w1 (z half)
                _weight_spec((L, H)),     # d_w1 (s half)
                _weight_spec((H, D)),     # d_w2
            ],
            out_specs=[row_spec(3 * D), row_spec(9 * L)],
        ),
        compiler_params=pltpu.CompilerParams(
            dimension_semantics=("parallel",),
            vmem_limit_bytes=vmem_limit,
        ),
    )(tg, bg, eps,
      params["z_w_in"], params["z_w_heads"],
      params["s_w_in"], params["s_w_heads"],
      params["d_w1_z"], params["d_w1_s"], params["d_w2"])

    tg_outputs = recon[:, :D]
    bg_outputs = recon[:, D:2 * D]
    fg_outputs = recon[:, 2 * D:]
    (tg_z, tg_z_m, tg_z_lv,
     tg_s, tg_s_m, tg_s_lv,
     bg_z, bg_z_m, bg_z_lv) = [lat[:, k * L:(k + 1) * L] for k in range(9)]

    return dict(
        tg_outputs=tg_outputs, bg_outputs=bg_outputs, fg_outputs=fg_outputs,
        tg_z=tg_z, tg_z_m=tg_z_m, tg_z_lv=tg_z_lv,
        tg_s=tg_s, tg_s_m=tg_s_m, tg_s_lv=tg_s_lv,
        bg_z=bg_z, bg_z_m=bg_z_m, bg_z_lv=bg_z_lv,
    )


def contrastive_vae_forward(tg, bg, params, eps, *, block_b=512):
    """Full ContrastiveVAE.forward(tg, bg).

    eps: (B, 3*latent) standard-normal noise packed as [eps_tg_z|eps_tg_s|eps_bg_z]
    (the torch.randn_like draws made deterministic / explicit).
    """
    B, D = tg.shape
    H = params["z_w_in"].shape[1]
    L = params["d_w1_z"].shape[0]
    itemsize = jnp.dtype(tg.dtype).itemsize

    budget = _vmem_budget()
    bb = _choose_block_b(B, D, H, L, itemsize, block_b, budget)
    fp = _footprint_bytes(bb, D, H, L, itemsize, _weight_buffer_count())
    vmem_limit = int(min(budget, max(int(fp * 1.25), 16 << 20)))

    return _forward_impl(tg, bg, eps, params, block_b=bb, vmem_limit=vmem_limit)


# ----------------------------------------------------------------------------
# Pure-JAX reference
# ----------------------------------------------------------------------------
def forward_ref(tg, bg, params, eps):
    L = params["d_w1_z"].shape[0]
    eps_tg_z, eps_tg_s, eps_bg_z = eps[:, :L], eps[:, L:2 * L], eps[:, 2 * L:]

    def enc(x, w_in, w_heads, e):
        h = jnp.maximum(x @ w_in, 0.0)
        heads = h @ w_heads
        m, lv = heads[:, :L], heads[:, L:]
        return m + e * jnp.exp(0.5 * lv), m, lv

    tg_z, tg_z_m, tg_z_lv = enc(tg, params["z_w_in"], params["z_w_heads"], eps_tg_z)
    tg_s, tg_s_m, tg_s_lv = enc(tg, params["s_w_in"], params["s_w_heads"], eps_tg_s)
    bg_z, bg_z_m, bg_z_lv = enc(bg, params["z_w_in"], params["z_w_heads"], eps_bg_z)

    d_w1 = jnp.concatenate([params["d_w1_z"], params["d_w1_s"]], axis=0)

    def dec(y):
        return jnp.maximum(y @ d_w1, 0.0) @ params["d_w2"]

    zeros = jnp.zeros_like(tg_z)
    tg_outputs = dec(jnp.concatenate([tg_z, tg_s], -1))
    bg_outputs = dec(jnp.concatenate([bg_z, zeros], -1))
    fg_outputs = dec(jnp.concatenate([zeros, tg_s], -1))
    return dict(
        tg_outputs=tg_outputs, bg_outputs=bg_outputs, fg_outputs=fg_outputs,
        tg_z=tg_z, tg_z_m=tg_z_m, tg_z_lv=tg_z_lv,
        tg_s=tg_s, tg_s_m=tg_s_m, tg_s_lv=tg_s_lv,
        bg_z=bg_z, bg_z_m=bg_z_m, bg_z_lv=bg_z_lv,
    )


# ----------------------------------------------------------------------------
# Demo / self-check
# ----------------------------------------------------------------------------
if __name__ == "__main__":
    B, input_dim, hidden_dim, latent_dim = 8, 16, 32, 8

    key = jax.random.PRNGKey(0)
    keys = jax.random.split(key, 12)

    def linear_init(k, fan_in, shape):
        bound = 1.0 / jnp.sqrt(fan_in)
        return jax.random.uniform(k, shape, jnp.float32, -bound, bound)

    # Weights stored (in_features, out_features); encoder heads fused to (H, 2L);
    # decoder first layer pre-split into its z and s halves.
    d_w1_full = linear_init(keys[6], 2 * latent_dim, (2 * latent_dim, hidden_dim))
    params = dict(
        z_w_in=linear_init(keys[0], input_dim, (input_dim, hidden_dim)),
        z_w_heads=jnp.concatenate(
            [linear_init(keys[1], hidden_dim, (hidden_dim, latent_dim)),
             linear_init(keys[2], hidden_dim, (hidden_dim, latent_dim))], axis=1),
        s_w_in=linear_init(keys[3], input_dim, (input_dim, hidden_dim)),
        s_w_heads=jnp.concatenate(
            [linear_init(keys[4], hidden_dim, (hidden_dim, latent_dim)),
             linear_init(keys[5], hidden_dim, (hidden_dim, latent_dim))], axis=1),
        d_w1_z=d_w1_full[:latent_dim],
        d_w1_s=d_w1_full[latent_dim:],
        d_w2=linear_init(keys[7], hidden_dim, (hidden_dim, input_dim)),
    )

    tg = jax.random.normal(keys[8], (B, input_dim), jnp.float32)
    bg = jax.random.normal(keys[9], (B, input_dim), jnp.float32)
    # Deterministic eps (torch.randn_like equivalent), packed [tg_z | tg_s | bg_z].
    eps = jax.random.normal(keys[10], (B, 3 * latent_dim), jnp.float32)

    out = contrastive_vae_forward(tg, bg, params, eps)
    jax.block_until_ready(out)

    ref = forward_ref(tg, bg, params, eps)
    for name in ref:
        assert jnp.allclose(out[name], ref[name], atol=1e-5, rtol=1e-5), name

    print("KERNEL_OK")
</pallas_src>

<mosaic_0001>
module attributes {stable_mosaic.version = 11 : i64} {
  func.func @_cvae_fused_kernel(%arg0: i32, %arg1: memref<8x16xf32, #tpu.memory_space<vmem>>, %arg2: memref<8x16xf32, #tpu.memory_space<vmem>>, %arg3: memref<8x24xf32, #tpu.memory_space<vmem>>, %arg4: memref<16x32xf32, #tpu.memory_space<vmem>>, %arg5: memref<32x16xf32, #tpu.memory_space<vmem>>, %arg6: memref<16x32xf32, #tpu.memory_space<vmem>>, %arg7: memref<32x16xf32, #tpu.memory_space<vmem>>, %arg8: memref<8x32xf32, #tpu.memory_space<vmem>>, %arg9: memref<8x32xf32, #tpu.memory_space<vmem>>, %arg10: memref<32x16xf32, #tpu.memory_space<vmem>>, %arg11: memref<8x48xf32, #tpu.memory_space<vmem>>, %arg12: memref<8x72xf32, #tpu.memory_space<vmem>>) attributes {dimension_semantics = [#tpu.dimension_semantics<parallel>], iteration_bounds = array<i64: 1>, scalar_prefetch = 0 : i64, scratch_operands = 0 : i64, tpu.core_type = #tpu.core_type<tc>, window_params = [{transform_indices = @transform_0, window_bounds = array<i64: 8, 16>}, {transform_indices = @transform_1, window_bounds = array<i64: 8, 16>}, {transform_indices = @transform_2, window_bounds = array<i64: 8, 24>}, {pipeline_mode = #tpu.pipeline_mode<synchronous>, transform_indices = @transform_3, window_bounds = array<i64: 16, 32>}, {pipeline_mode = #tpu.pipeline_mode<synchronous>, transform_indices = @transform_4, window_bounds = array<i64: 32, 16>}, {pipeline_mode = #tpu.pipeline_mode<synchronous>, transform_indices = @transform_5, window_bounds = array<i64: 16, 32>}, {pipeline_mode = #tpu.pipeline_mode<synchronous>, transform_indices = @transform_6, window_bounds = array<i64: 32, 16>}, {pipeline_mode = #tpu.pipeline_mode<synchronous>, transform_indices = @transform_7, window_bounds = array<i64: 8, 32>}, {pipeline_mode = #tpu.pipeline_mode<synchronous>, transform_indices = @transform_8, window_bounds = array<i64: 8, 32>}, {pipeline_mode = #tpu.pipeline_mode<synchronous>, transform_indices = @transform_9, window_bounds = array<i64: 32, 16>}, {transform_indices = @transform_10, window_bounds = array<i64: 8, 48>}, {transform_indices = @transform_11, window_bounds = array<i64: 8, 72>}]} {
    %c0 = arith.constant 0 : index
    %c0_0 = arith.constant 0 : index
    %0 = vector.load %arg1[%c0, %c0_0] : memref<8x16xf32, #tpu.memory_space<vmem>>, vector<8x16xf32>
    %c0_1 = arith.constant 0 : index
    %c0_2 = arith.constant 0 : index
    %1 = vector.load %arg2[%c0_1, %c0_2] : memref<8x16xf32, #tpu.memory_space<vmem>>, vector<8x16xf32>
    %c0_3 = arith.constant 0 : index
    %c0_4 = arith.constant 0 : index
    %2 = vector.load %arg4[%c0_3, %c0_4] : memref<16x32xf32, #tpu.memory_space<vmem>>, vector<16x32xf32>
    %c0_5 = arith.constant 0 : index
    %c0_6 = arith.constant 0 : index
    %3 = vector.load %arg5[%c0_5, %c0_6] : memref<32x16xf32, #tpu.memory_space<vmem>>, vector<32x16xf32>
    %c0_7 = arith.constant 0 : index
    %c0_8 = arith.constant 0 : index
    %4 = vector.load %arg6[%c0_7, %c0_8] : memref<16x32xf32, #tpu.memory_space<vmem>>, vector<16x32xf32>
    %c0_9 = arith.constant 0 : index
    %c0_10 = arith.constant 0 : index
    %5 = vector.load %arg7[%c0_9, %c0_10] : memref<32x16xf32, #tpu.memory_space<vmem>>, vector<32x16xf32>
    %cst = arith.constant dense<0.000000e+00> : vector<8x32xf32>
    %6 = tpu.matmul %0, %2, %cst {dimension_numbers = #tpu.dot_dimension_numbers<[1], [0], [0], [1], [0, 0, 1, 1], [], []>} : vector<8x16xf32>, vector<16x32xf32>, vector<8x32xf32> -> vector<8x32xf32>
    %cst_11 = arith.constant 0.000000e+00 : f32
    %7 = vector.broadcast %cst_11 : f32 to vector<8x32xf32>
    %8 = arith.maximumf %6, %7 : vector<8x32xf32>
    %cst_12 = arith.constant dense<0.000000e+00> : vector<8x32xf32>
    %9 = tpu.matmul %1, %2, %cst_12 {dimension_numbers = #tpu.dot_dimension_numbers<[1], [0], [0], [1], [0, 0, 1, 1], [], []>} : vector<8x16xf32>, vector<16x32xf32>, vector<8x32xf32> -> vector<8x32xf32>
    %cst_13 = arith.constant 0.000000e+00 : f32
    %10 = vector.broadcast %cst_13 : f32 to vector<8x32xf32>
    %11 = arith.maximumf %9, %10 : vector<8x32xf32>
    %cst_14 = arith.constant dense<0.000000e+00> : vector<8x32xf32>
    %12 = tpu.matmul %0, %4, %cst_14 {dimension_numbers = #tpu.dot_dimension_numbers<[1], [0], [0], [1], [0, 0, 1, 1], [], []>} : vector<8x16xf32>, vector<16x32xf32>, vector<8x32xf32> -> vector<8x32xf32>
    %cst_15 = arith.constant 0.000000e+00 : f32
    %13 = vector.broadcast %cst_15 : f32 to vector<8x32xf32>
    %14 = arith.maximumf %12, %13 : vector<8x32xf32>
    %cst_16 = arith.constant dense<0.000000e+00> : vector<8x16xf32>
    %15 = tpu.matmul %8, %3, %cst_16 {dimension_numbers = #tpu.dot_dimension_numbers<[1], [0], [0], [1], [0, 0, 1, 1], [], []>} : vector<8x32xf32>, vector<32x16xf32>, vector<8x16xf32> -> vector<8x16xf32>
    %cst_17 = arith.constant dense<0.000000e+00> : vector<8x16xf32>
    %16 = tpu.matmul %11, %3, %cst_17 {dimension_numbers = #tpu.dot_dimension_numbers<[1], [0], [0], [1], [0, 0, 1, 1], [], []>} : vector<8x32xf32>, vector<32x16xf32>, vector<8x16xf32> -> vector<8x16xf32>
    %cst_18 = arith.constant dense<0.000000e+00> : vector<8x16xf32>
    %17 = tpu.matmul %14, %5, %cst_18 {dimension_numbers = #tpu.dot_dimension_numbers<[1], [0], [0], [1], [0, 0, 1, 1], [], []>} : vector<8x32xf32>, vector<32x16xf32>, vector<8x16xf32> -> vector<8x16xf32>
    %c0_19 = arith.constant 0 : index
    %c0_20 = arith.constant 0 : index
    %18 = vector.load %arg3[%c0_19, %c0_20] : memref<8x24xf32, #tpu.memory_space<vmem>>, vector<8x24xf32>
    %19 = vector.extract_strided_slice %18 {offsets = [0, 0], sizes = [8, 8], strides = [1, 1]} : vector<8x24xf32> to vector<8x8xf32>
    %20 = vector.extract_strided_slice %15 {offsets = [0, 0], sizes = [8, 8], strides = [1, 1]} : vector<8x16xf32> to vector<8x8xf32>
    %21 = vector.extract_strided_slice %15 {offsets = [0, 8], sizes = [8, 8], strides = [1, 1]} : vector<8x16xf32> to vector<8x8xf32>
    %cst_21 = arith.constant 5.000000e-01 : f32
    %22 = vector.broadcast %cst_21 : f32 to vector<8x8xf32>
    %23 = arith.mulf %22, %21 : vector<8x8xf32>
    %24 = math.exp %23 : vector<8x8xf32>
    %25 = arith.mulf %19, %24 : vector<8x8xf32>
    %26 = arith.addf %20, %25 : vector<8x8xf32>
    %27 = vector.extract_strided_slice %18 {offsets = [0, 8], sizes = [8, 8], strides = [1, 1]} : vector<8x24xf32> to vector<8x8xf32>
    %28 = vector.extract_strided_slice %17 {offsets = [0, 0], sizes = [8, 8], strides = [1, 1]} : vector<8x16xf32> to vector<8x8xf32>
    %29 = vector.extract_strided_slice %17 {offsets = [0, 8], sizes = [8, 8], strides = [1, 1]} : vector<8x16xf32> to vector<8x8xf32>
    %cst_22 = arith.constant 5.000000e-01 : f32
    %30 = vector.broadcast %cst_22 : f32 to vector<8x8xf32>
    %31 = arith.mulf %30, %29 : vector<8x8xf32>
    %32 = math.exp %31 : vector<8x8xf32>
    %33 = arith.mulf %27, %32 : vector<8x8xf32>
    %34 = arith.addf %28, %33 : vector<8x8xf32>
    %35 = vector.extract_strided_slice %18 {offsets = [0, 16], sizes = [8, 8], strides = [1, 1]} : vector<8x24xf32> to vector<8x8xf32>
    %36 = vector.extract_strided_slice %16 {offsets = [0, 0], sizes = [8, 8], strides = [1, 1]} : vector<8x16xf32> to vector<8x8xf32>
    %37 = vector.extract_strided_slice %16 {offsets = [0, 8], sizes = [8, 8], strides = [1, 1]} : vector<8x16xf32> to vector<8x8xf32>
    %cst_23 = arith.constant 5.000000e-01 : f32
    %38 = vector.broadcast %cst_23 : f32 to vector<8x8xf32>
    %39 = arith.mulf %38, %37 : vector<8x8xf32>
    %40 = math.exp %39 : vector<8x8xf32>
    %41 = arith.mulf %35, %40 : vector<8x8xf32>
    %42 = arith.addf %36, %41 : vector<8x8xf32>
    %c0_24 = arith.constant 0 : index
    %c0_25 = arith.constant 0 : index
    %43 = vector.load %arg8[%c0_24, %c0_25] : memref<8x32xf32, #tpu.memory_space<vmem>>, vector<8x32xf32>
    %c0_26 = arith.constant 0 : index
    %c0_27 = arith.constant 0 : index
    %44 = vector.load %arg9[%c0_26, %c0_27] : memref<8x32xf32, #tpu.memory_space<vmem>>, vector<8x32xf32>
    %c0_28 = arith.constant 0 : index
    %c0_29 = arith.constant 0 : index
    %45 = vector.load %arg10[%c0_28, %c0_29] : memref<32x16xf32, #tpu.memory_space<vmem>>, vector<32x16xf32>
    %cst_30 = arith.constant dense<0.000000e+00> : vector<8x32xf32>
    %46 = tpu.matmul %26, %43, %cst_30 {dimension_numbers = #tpu.dot_dimension_numbers<[1], [0], [0], [1], [0, 0, 1, 1], [], []>} : vector<8x8xf32>, vector<8x32xf32>, vector<8x32xf32> -> vector<8x32xf32>
    %cst_31 = arith.constant dense<0.000000e+00> : vector<8x32xf32>
    %47 = tpu.matmul %34, %44, %cst_31 {dimension_numbers = #tpu.dot_dimension_numbers<[1], [0], [0], [1], [0, 0, 1, 1], [], []>} : vector<8x8xf32>, vector<8x32xf32>, vector<8x32xf32> -> vector<8x32xf32>
    %cst_32 = arith.constant dense<0.000000e+00> : vector<8x32xf32>
    %48 = tpu.matmul %42, %43, %cst_32 {dimension_numbers = #tpu.dot_dimension_numbers<[1], [0], [0], [1], [0, 0, 1, 1], [], []>} : vector<8x8xf32>, vector<8x32xf32>, vector<8x32xf32> -> vector<8x32xf32>
    %49 = arith.addf %46, %47 : vector<8x32xf32>
    %cst_33 = arith.constant 0.000000e+00 : f32
    %50 = vector.broadcast %cst_33 : f32 to vector<8x32xf32>
    %51 = arith.maximumf %49, %50 : vector<8x32xf32>
    %cst_34 = arith.constant 0.000000e+00 : f32
    %52 = vector.broadcast %cst_34 : f32 to vector<8x32xf32>
    %53 = arith.maximumf %48, %52 : vector<8x32xf32>
    %cst_35 = arith.constant 0.000000e+00 : f32
    %54 = vector.broadcast %cst_35 : f32 to vector<8x32xf32>
    %55 = arith.maximumf %47, %54 : vector<8x32xf32>
    %cst_36 = arith.constant dense<0.000000e+00> : vector<8x16xf32>
    %56 = tpu.matmul %51, %45, %cst_36 {dimension_numbers = #tpu.dot_dimension_numbers<[1], [0], [0], [1], [0, 0, 1, 1], [], []>} : vector<8x32xf32>, vector<32x16xf32>, vector<8x16xf32> -> vector<8x16xf32>
    %cst_37 = arith.constant dense<0.000000e+00> : vector<8x16xf32>
    %57 = tpu.matmul %53, %45, %cst_37 {dimension_numbers = #tpu.dot_dimension_numbers<[1], [0], [0], [1], [0, 0, 1, 1], [], []>} : vector<8x32xf32>, vector<32x16xf32>, vector<8x16xf32> -> vector<8x16xf32>
    %cst_38 = arith.constant dense<0.000000e+00> : vector<8x16xf32>
    %58 = tpu.matmul %55, %45, %cst_38 {dimension_numbers = #tpu.dot_dimension_numbers<[1], [0], [0], [1], [0, 0, 1, 1], [], []>} : vector<8x32xf32>, vector<32x16xf32>, vector<8x16xf32> -> vector<8x16xf32>
    %59 = tpu.concatenate %56, %57, %58 in 1 : vector<8x16xf32>, vector<8x16xf32>, vector<8x16xf32> -> vector<8x48xf32>
    %c0_39 = arith.constant 0 : index
    %c0_40 = arith.constant 0 : index
    %60 = vector.load %arg11[%c0_39, %c0_40] : memref<8x48xf32, #tpu.memory_space<vmem>>, vector<8x48xf32>
    tpu.vector_store %arg11[%c0_39, %c0_40], %59 {strides = array<i32>} : memref<8x48xf32, #tpu.memory_space<vmem>>, vector<8x48xf32>,
    %61 = tpu.concatenate %26, %20, %21, %34, %28, %29, %42, %36, %37 in 1 : vector<8x8xf32>, vector<8x8xf32>, vector<8x8xf32>, vector<8x8xf32>, vector<8x8xf32>, vector<8x8xf32>, vector<8x8xf32>, vector<8x8xf32>, vector<8x8xf32> -> vector<8x72xf32>
    %c0_41 = arith.constant 0 : index
    %c0_42 = arith.constant 0 : index
    %62 = vector.load %arg12[%c0_41, %c0_42] : memref<8x72xf32, #tpu.memory_space<vmem>>, vector<8x72xf32>
    tpu.vector_store %arg12[%c0_41, %c0_42], %61 {strides = array<i32>} : memref<8x72xf32, #tpu.memory_space<vmem>>, vector<8x72xf32>,
    return
  }
  func.func @transform_0(%arg0: i32) -> (i32, i32) {
    %c0_i32 = arith.constant 0 : i32
    %c0_i32_0 = arith.constant 0 : i32
    return %arg0, %c0_i32 : i32, i32
  }
  func.func @transform_1(%arg0: i32) -> (i32, i32) {
    %c0_i32 = arith.constant 0 : i32
    %c0_i32_0 = arith.constant 0 : i32
    return %arg0, %c0_i32 : i32, i32
  }
  func.func @transform_2(%arg0: i32) -> (i32, i32) {
    %c0_i32 = arith.constant 0 : i32
    %c0_i32_0 = arith.constant 0 : i32
    return %arg0, %c0_i32 : i32, i32
  }
  func.func @transform_3(%arg0: i32) -> (i32, i32) {
    %c0_i32 = arith.constant 0 : i32
    %c0_i32_0 = arith.constant 0 : i32
    %c0_i32_1 = arith.constant 0 : i32
    return %c0_i32, %c0_i32_0 : i32, i32
  }
  func.func @transform_4(%arg0: i32) -> (i32, i32) {
    %c0_i32 = arith.constant 0 : i32
    %c0_i32_0 = arith.constant 0 : i32
    %c0_i32_1 = arith.constant 0 : i32
    return %c0_i32, %c0_i32_0 : i32, i32
  }
  func.func @transform_5(%arg0: i32) -> (i32, i32) {
    %c0_i32 = arith.constant 0 : i32
    %c0_i32_0 = arith.constant 0 : i32
    %c0_i32_1 = arith.constant 0 : i32
    return %c0_i32, %c0_i32_0 : i32, i32
  }
  func.func @transform_6(%arg0: i32) -> (i32, i32) {
    %c0_i32 = arith.constant 0 : i32
    %c0_i32_0 = arith.constant 0 : i32
    %c0_i32_1 = arith.constant 0 : i32
    return %c0_i32, %c0_i32_0 : i32, i32
  }
  func.func @transform_7(%arg0: i32) -> (i32, i32) {
    %c0_i32 = arith.constant 0 : i32
    %c0_i32_0 = arith.constant 0 : i32
    %c0_i32_1 = arith.constant 0 : i32
    return %c0_i32, %c0_i32_0 : i32, i32
  }
  func.func @transform_8(%arg0: i32) -> (i32, i32) {
    %c0_i32 = arith.constant 0 : i32
    %c0_i32_0 = arith.constant 0 : i32
    %c0_i32_1 = arith.constant 0 : i32
    return %c0_i32, %c0_i32_0 : i32, i32
  }
  func.func @transform_9(%arg0: i32) -> (i32, i32) {
    %c0_i32 = arith.constant 0 : i32
    %c0_i32_0 = arith.constant 0 : i32
    %c0_i32_1 = arith.constant 0 : i32
    return %c0_i32, %c0_i32_0 : i32, i32
  }
  func.func @transform_10(%arg0: i32) -> (i32, i32) {
    %c0_i32 = arith.constant 0 : i32
    %c0_i32_0 = arith.constant 0 : i32
    return %arg0, %c0_i32 : i32, i32
  }
  func.func @transform_11(%arg0: i32) -> (i32, i32) {
    %c0_i32 = arith.constant 0 : i32
    %c0_i32_0 = arith.constant 0 : i32
    return %arg0, %c0_i32 : i32, i32
  }
}

</mosaic_0001>

<llo_original>
// kernel: _forward_impl.1
$region0: #{_forward_impl.1}
  #allocation0 [shape = 'u32[]', space=smem, size = 0x4, offset = 0x4, fixed_abs, tag = 'smem constant byte address 0x4 - core index']
  #allocation1 [shape = 'u32[144,128]{1,0:T(1,128)}', space=vmem, size = 0x12000, scoped, tag = 'internal scratch']
  %s0 = inlined_call_operand.vmem [shape: f32[8,16], index: 0, kind: input, shape index: {}]
  %s1 = inlined_call_operand.vmem [shape: f32[8,16], index: 1, kind: input, shape index: {}]
  %s2 = inlined_call_operand.vmem [shape: f32[8,24], index: 2, kind: input, shape index: {}]
  %s3 = inlined_call_operand.vmem [shape: f32[16,32], index: 3, kind: input, shape index: {}]
  %s4 = inlined_call_operand.vmem [shape: f32[32,16], index: 4, kind: input, shape index: {}]
  %s5 = inlined_call_operand.vmem [shape: f32[16,32], index: 5, kind: input, shape index: {}]
  %s6 = inlined_call_operand.vmem [shape: f32[32,16], index: 6, kind: input, shape index: {}]
  %s7 = inlined_call_operand.vmem [shape: f32[8,32], index: 7, kind: input, shape index: {}]
  %s8 = inlined_call_operand.vmem [shape: f32[8,32], index: 8, kind: input, shape index: {}]
  %s9 = inlined_call_operand.vmem [shape: f32[32,16], index: 9, kind: input, shape index: {}]
  %s10 = inlined_call_operand.vmem [shape: f32[8,48], index: 10, kind: output, shape index: {0}]
  %s11 = inlined_call_operand.vmem [shape: f32[8,72], index: 11, kind: output, shape index: {1}]
  %12 = xla_tuple %s10, %s11
  %s13 = sld [smem:[#allocation0]]
  $region58: #{_forward_impl.1} parent=0
    _
  %s15 = ssub.s32 1, %s13
  %s16 = scalar_select 0, %s15, %s13
  // Predicated region
  $region2: #{_forward_impl.1} parent=0 // pred_check
    _
  $region3: #{_forward_impl.1} parent=0 // pred_check_branch
    %18 = sbr.rel (0) target = $region5
  $region4: #{_forward_impl.1} parent=0 // pred_region
    _
  $region5: #{_forward_impl.1} parent=0 // pred_fallthru
    _
  // Predicated region
  $region6: #{_forward_impl.1} parent=0 // pred_check
    _
  $region7: #{_forward_impl.1} parent=0 // pred_check_branch
    %20 = sbr.rel (0) target = $region9
  $region8: #{_forward_impl.1} parent=0 // pred_region
    _
  $region9: #{_forward_impl.1} parent=0 // pred_fallthru
    _
  // Predicated region
  $region10: #{_forward_impl.1} parent=0 // pred_check
    _
  $region11: #{_forward_impl.1} parent=0 // pred_check_branch
    %22 = sbr.rel (0) target = $region13
  $region12: #{_forward_impl.1} parent=0 // pred_region
    _
  $region13: #{_forward_impl.1} parent=0 // pred_fallthru
    _
  // Predicated region
  $region14: #{_forward_impl.1} parent=0 // pred_check
    _
  $region15: #{_forward_impl.1} parent=0 // pred_check_branch
    %24 = sbr.rel (0) target = $region17
  $region16: #{_forward_impl.1} parent=0 // pred_region
    _
  $region17: #{_forward_impl.1} parent=0 // pred_fallthru
    _
  // Predicated region
  $region18: #{_forward_impl.1} parent=0 // pred_check
    _
  $region19: #{_forward_impl.1} parent=0 // pred_check_branch
    %26 = sbr.rel (0) target = $region21
  $region20: #{_forward_impl.1} parent=0 // pred_region
    _
  $region21: #{_forward_impl.1} parent=0 // pred_fallthru
    _
  // Predicated region
  $region22: #{_forward_impl.1} parent=0 // pred_check
    _
  $region23: #{_forward_impl.1} parent=0 // pred_check_branch
    %28 = sbr.rel (0) target = $region25
  $region24: #{_forward_impl.1} parent=0 // pred_region
    _
  $region25: #{_forward_impl.1} parent=0 // pred_fallthru
    _
  // Predicated region
  $region26: #{_forward_impl.1} parent=0 // pred_check
    _
  $region27: #{_forward_impl.1} parent=0 // pred_check_branch
    %30 = sbr.rel (0) target = $region29
  $region28: #{_forward_impl.1} parent=0 // pred_region
    _
  $region29: #{_forward_impl.1} parent=0 // pred_fallthru
    _
  // Predicated region
  $region30: #{_forward_impl.1} parent=0 // pred_check
    _
  $region31: #{_forward_impl.1} parent=0 // pred_check_branch
    %32 = sbr.rel (0) target = $region33
  $region32: #{_forward_impl.1} parent=0 // pred_region
    _
  $region33: #{_forward_impl.1} parent=0 // pred_fallthru
    _
  // Predicated region
  $region34: #{_forward_impl.1} parent=0 // pred_check
    _
  $region35: #{_forward_impl.1} parent=0 // pred_check_branch
    %34 = sbr.rel (0) target = $region37
  $region36: #{_forward_impl.1} parent=0 // pred_region
    _
  $region37: #{_forward_impl.1} parent=0 // pred_fallthru
    _
  // Predicated region
  $region38: #{_forward_impl.1} parent=0 // pred_check
    _
  $region39: #{_forward_impl.1} parent=0 // pred_check_branch
    %36 = sbr.rel (0) target = $region41
  $region40: #{_forward_impl.1} parent=0 // pred_region
    _
  $region41: #{_forward_impl.1} parent=0 // pred_fallthru
    _
  %v37 = vld [vmem:[%s0] sm:$0xff]
  %v38 = vld [vmem:[%s1] sm:$0xff]
  %v39 = vld [vmem:[%s3] sm:$0xff]
  %v40 = vld [vmem:[%s3 + $0x8] sm:$0xff]
  %v41 = vld [vmem:[%s4] sm:$0xff]
  %v42 = vld [vmem:[%s4 + $0x8] sm:$0xff]
  %v43 = vld [vmem:[%s4 + $0x10] sm:$0xff]
  %v44 = vld [vmem:[%s4 + $0x18] sm:$0xff]
  %v45 = vld [vmem:[%s5] sm:$0xff]
  %v46 = vld [vmem:[%s5 + $0x8] sm:$0xff]
  %v47 = vld [vmem:[%s6] sm:$0xff]
  %v48 = vld [vmem:[%s6 + $0x8] sm:$0xff]
  %v49 = vld [vmem:[%s6 + $0x10] sm:$0xff]
  %v50 = vld [vmem:[%s6 + $0x18] sm:$0xff]
  %vm51 = vcmask 130048
  %v53 = vsel %vm51, %v37, 0
  %55 = vmatprep.subr.mxu0 0.0
  %56 = vmatpush1.msra.mxu0 %v39
  %57 = vmatprep.subr.mxu0 0.0
  %58 = vmatpush1.msra.mxu0 %v40
  %59 = vmatprep.subr.mxu0 0.0
  %60 = vmatpush1.msra.mxu0 0.0
  %61 = vmatprep.subr.mxu0 0.0
  %62 = vmatpush1.msra.mxu0 0.0
  %63 = vmatprep.subr.mxu0 0.0
  %64 = vmatpush1.msra.mxu0 0.0
  %65 = vmatprep.subr.mxu0 0.0
  %66 = vmatpush1.msra.mxu0 0.0
  %67 = vmatprep.subr.mxu0 0.0
  %68 = vmatpush1.msra.mxu0 0.0
  %69 = vmatprep.subr.mxu0 0.0
  %70 = vmatpush1.msra.mxu0 0.0
  %71 = vmatprep.subr.mxu0 0.0
  %72 = vmatpush1.msra.mxu0 0.0
  %73 = vmatprep.subr.mxu0 0.0
  %74 = vmatpush1.msra.mxu0 0.0
  %75 = vmatprep.subr.mxu0 0.0
  %76 = vmatpush1.msra.mxu0 0.0
  %77 = vmatprep.subr.mxu0 0.0
  %78 = vmatpush1.msra.mxu0 0.0
  %79 = vmatprep.subr.mxu0 0.0
  %80 = vmatpush1.msra.mxu0 0.0
  %81 = vmatprep.subr.mxu0 0.0
  %82 = vmatpush1.msra.mxu0 0.0
  %83 = vmatprep.subr.mxu0 0.0
  %84 = vmatpush1.msra.mxu0 0.0
  %85 = vmatprep.subr.mxu0 0.0
  %86 = vmatpush1.msra.mxu0 0.0
  %87 = vmatprep.subr.mxu0 0.0
  %88 = vmatpush1.msra.mxu0 0.0
  %89 = vmatprep.subr.mxu0 0.0
  %90 = vmatpush1.msra.mxu0 0.0
  %91 = vmatprep.subr.mxu0 0.0
  %92 = vmatpush1.msra.mxu0 0.0
  %93 = vmatprep.subr.mxu0 0.0
  %94 = vmatpush1.msra.mxu0 0.0
  %95 = vmatprep.subr.mxu0 0.0
  %96 = vmatpush1.msra.mxu0 0.0
  %97 = vmatprep.subr.mxu0 0.0
  %98 = vmatpush1.msra.mxu0 0.0
  %99 = vmatprep.subr.mxu0 0.0
  %100 = vmatpush1.msra.mxu0 0.0
  %101 = vmatprep.subr.mxu0 0.0
  %102 = vmatpush1.msra.mxu0 0.0
  %103 = vmatprep.subr.mxu0 0.0
  %104 = vmatpush1.msra.mxu0 0.0
  %105 = vmatprep.subr.mxu0 0.0
  %106 = vmatpush1.msra.mxu0 0.0
  %107 = vmatprep.subr.mxu0 0.0
  %108 = vmatpush1.msra.mxu0 0.0
  %109 = vmatprep.subr.mxu0 0.0
  %110 = vmatpush1.msra.mxu0 0.0
  %111 = vmatprep.subr.mxu0 0.0
  %112 = vmatpush1.msra.mxu0 0.0
  %113 = vmatprep.subr.mxu0 0.0
  %114 = vmatpush1.msra.mxu0 0.0
  %115 = vmatprep.subr.mxu0 0.0
  %116 = vmatpush1.msra.mxu0 0.0
  %117 = vmatprep.subr.mxu0 0.0
  %118 = vmatpush1.msra.mxu0 0.0
  %119 = vmatprep.mubr.f32.mxu0 0.0
  %120 = vmatmul.mubr.f32.gmra.mrb[0].mxu0 %v53
  %v121 = vpop.f32.mrb[0].mxu0
  %v122 = vadd.f32 0.0, %v121
  %v123 = vpop.f32.mrb[0].mxu0
  %124 = vdwg.mxu0
  %v125 = vmax.f32 %v122, 0.0
  %v127 = vsel %vm51, %v38, 0
  %129 = vmatprep.subr.mxu0 0.0
  %130 = vmatpush1.msra.mxu0 %v39
  %131 = vmatprep.subr.mxu0 0.0
  %132 = vmatpush1.msra.mxu0 %v40
  %133 = vmatprep.subr.mxu0 0.0
  %134 = vmatpush1.msra.mxu0 0.0
  %135 = vmatprep.subr.mxu0 0.0
  %136 = vmatpush1.msra.mxu0 0.0
  %137 = vmatprep.subr.mxu0 0.0
  %138 = vmatpush1.msra.mxu0 0.0
  %139 = vmatprep.subr.mxu0 0.0
  %140 = vmatpush1.msra.mxu0 0.0
  %141 = vmatprep.subr.mxu0 0.0
  %142 = vmatpush1.msra.mxu0 0.0
  %143 = vmatprep.subr.mxu0 0.0
  %144 = vmatpush1.msra.mxu0 0.0
  %145 = vmatprep.subr.mxu0 0.0
  %146 = vmatpush1.msra.mxu0 0.0
  %147 = vmatprep.subr.mxu0 0.0
  %148 = vmatpush1.msra.mxu0 0.0
  %149 = vmatprep.subr.mxu0 0.0
  %150 = vmatpush1.msra.mxu0 0.0
  %151 = vmatprep.subr.mxu0 0.0
  %152 = vmatpush1.msra.mxu0 0.0
  %153 = vmatprep.subr.mxu0 0.0
  %154 = vmatpush1.msra.mxu0 0.0
  %155 = vmatprep.subr.mxu0 0.0
  %156 = vmatpush1.msra.mxu0 0.0
  %157 = vmatprep.subr.mxu0 0.0
  %158 = vmatpush1.msra.mxu0 0.0
  %159 = vmatprep.subr.mxu0 0.0
  %160 = vmatpush1.msra.mxu0 0.0
  %161 = vmatprep.subr.mxu0 0.0
  %162 = vmatpush1.msra.mxu0 0.0
  %163 = vmatprep.subr.mxu0 0.0
  %164 = vmatpush1.msra.mxu0 0.0
  %165 = vmatprep.subr.mxu0 0.0
  %166 = vmatpush1.msra.mxu0 0.0
  %167 = vmatprep.subr.mxu0 0.0
  %168 = vmatpush1.msra.mxu0 0.0
  %169 = vmatprep.subr.mxu0 0.0
  %170 = vmatpush1.msra.mxu0 0.0
  %171 = vmatprep.subr.mxu0 0.0
  %172 = vmatpush1.msra.mxu0 0.0
  %173 = vmatprep.subr.mxu0 0.0
  %174 = vmatpush1.msra.mxu0 0.0
  %175 = vmatprep.subr.mxu0 0.0
  %176 = vmatpush1.msra.mxu0 0.0
  %177 = vmatprep.subr.mxu0 0.0
  %178 = vmatpush1.msra.mxu0 0.0
  %179 = vmatprep.subr.mxu0 0.0
  %180 = vmatpush1.msra.mxu0 0.0
  %181 = vmatprep.subr.mxu0 0.0
  %182 = vmatpush1.msra.mxu0 0.0
  %183 = vmatprep.subr.mxu0 0.0
  %184 = vmatpush1.msra.mxu0 0.0
  %185 = vmatprep.subr.mxu0 0.0
  %186 = vmatpush1.msra.mxu0 0.0
  %187 = vmatprep.subr.mxu0 0.0
  %188 = vmatpush1.msra.mxu0 0.0
  %189 = vmatprep.subr.mxu0 0.0
  %190 = vmatpush1.msra.mxu0 0.0
  %191 = vmatprep.subr.mxu0 0.0
  %192 = vmatpush1.msra.mxu0 0.0
  %193 = vmatprep.mubr.f32.mxu0 0.0
  %194 = vmatmul.mubr.f32.gmra.mrb[0].mxu0 %v127
  %v195 = vpop.f32.mrb[0].mxu0
  %v196 = vadd.f32 0.0, %v195
  %v197 = vpop.f32.mrb[0].mxu0
  %198 = vdwg.mxu0
  %v199 = vmax.f32 %v196, 0.0
  %200 = vmatprep.subr.mxu0 0.0
  %201 = vmatpush1.msra.mxu0 %v45
  %202 = vmatprep.subr.mxu0 0.0
  %203 = vmatpush1.msra.mxu0 %v46
  %204 = vmatprep.subr.mxu0 0.0
  %205 = vmatpush1.msra.mxu0 0.0
  %206 = vmatprep.subr.mxu0 0.0
  %207 = vmatpush1.msra.mxu0 0.0
  %208 = vmatprep.subr.mxu0 0.0
  %209 = vmatpush1.msra.mxu0 0.0
  %210 = vmatprep.subr.mxu0 0.0
  %211 = vmatpush1.msra.mxu0 0.0
  %212 = vmatprep.subr.mxu0 0.0
  %213 = vmatpush1.msra.mxu0 0.0
  %214 = vmatprep.subr.mxu0 0.0
  %215 = vmatpush1.msra.mxu0 0.0
  %216 = vmatprep.subr.mxu0 0.0
  %217 = vmatpush1.msra.mxu0 0.0
  %218 = vmatprep.subr.mxu0 0.0
  %219 = vmatpush1.msra.mxu0 0.0
  %220 = vmatprep.subr.mxu0 0.0
  %221 = vmatpush1.msra.mxu0 0.0
  %222 = vmatprep.subr.mxu0 0.0
  %223 = vmatpush1.msra.mxu0 0.0
  %224 = vmatprep.subr.mxu0 0.0
  %225 = vmatpush1.msra.mxu0 0.0
  %226 = vmatprep.subr.mxu0 0.0
  %227 = vmatpush1.msra.mxu0 0.0
  %228 = vmatprep.subr.mxu0 0.0
  %229 = vmatpush1.msra.mxu0 0.0
  %230 = vmatprep.subr.mxu0 0.0
  %231 = vmatpush1.msra.mxu0 0.0
  %232 = vmatprep.subr.mxu0 0.0
  %233 = vmatpush1.msra.mxu0 0.0
  %234 = vmatprep.subr.mxu0 0.0
  %235 = vmatpush1.msra.mxu0 0.0
  %236 = vmatprep.subr.mxu0 0.0
  %237 = vmatpush1.msra.mxu0 0.0
  %238 = vmatprep.subr.mxu0 0.0
  %239 = vmatpush1.msra.mxu0 0.0
  %240 = vmatprep.subr.mxu0 0.0
  %241 = vmatpush1.msra.mxu0 0.0
  %242 = vmatprep.subr.mxu0 0.0
  %243 = vmatpush1.msra.mxu0 0.0
  %244 = vmatprep.subr.mxu0 0.0
  %245 = vmatpush1.msra.mxu0 0.0
  %246 = vmatprep.subr.mxu0 0.0
  %247 = vmatpush1.msra.mxu0 0.0
  %248 = vmatprep.subr.mxu0 0.0
  %249 = vmatpush1.msra.mxu0 0.0
  %250 = vmatprep.subr.mxu0 0.0
  %251 = vmatpush1.msra.mxu0 0.0
  %252 = vmatprep.subr.mxu0 0.0
  %253 = vmatpush1.msra.mxu0 0.0
  %254 = vmatprep.subr.mxu0 0.0
  %255 = vmatpush1.msra.mxu0 0.0
  %256 = vmatprep.subr.mxu0 0.0
  %257 = vmatpush1.msra.mxu0 0.0
  %258 = vmatprep.subr.mxu0 0.0
  %259 = vmatpush1.msra.mxu0 0.0
  %260 = vmatprep.subr.mxu0 0.0
  %261 = vmatpush1.msra.mxu0 0.0
  %262 = vmatprep.subr.mxu0 0.0
  %263 = vmatpush1.msra.mxu0 0.0
  %264 = vmatprep.mubr.f32.mxu0 0.0
  %265 = vmatmul.mubr.f32.gmra.mrb[0].mxu0 %v53
  %v266 = vpop.f32.mrb[0].mxu0
  %v267 = vadd.f32 0.0, %v266
  %v268 = vpop.f32.mrb[0].mxu0
  %269 = vdwg.mxu0
  %v270 = vmax.f32 %v267, 0.0
  %vm271 = vcmask 261120
  %v273 = vsel %vm271, %v125, 0
  %275 = vmatprep.subr.mxu0 0.0
  %276 = vmatpush1.msra.mxu0 %v41
  %277 = vmatprep.subr.mxu0 0.0
  %278 = vmatpush1.msra.mxu0 %v42
  %279 = vmatprep.subr.mxu0 0.0
  %280 = vmatpush1.msra.mxu0 %v43
  %281 = vmatprep.subr.mxu0 0.0
  %282 = vmatpush1.msra.mxu0 %v44
  %283 = vmatprep.subr.mxu0 0.0
  %284 = vmatpush1.msra.mxu0 0.0
  %285 = vmatprep.subr.mxu0 0.0
  %286 = vmatpush1.msra.mxu0 0.0
  %287 = vmatprep.subr.mxu0 0.0
  %288 = vmatpush1.msra.mxu0 0.0
  %289 = vmatprep.subr.mxu0 0.0
  %290 = vmatpush1.msra.mxu0 0.0
  %291 = vmatprep.subr.mxu0 0.0
  %292 = vmatpush1.msra.mxu0 0.0
  %293 = vmatprep.subr.mxu0 0.0
  %294 = vmatpush1.msra.mxu0 0.0
  %295 = vmatprep.subr.mxu0 0.0
  %296 = vmatpush1.msra.mxu0 0.0
  %297 = vmatprep.subr.mxu0 0.0
  %298 = vmatpush1.msra.mxu0 0.0
  %299 = vmatprep.subr.mxu0 0.0
  %300 = vmatpush1.msra.mxu0 0.0
  %301 = vmatprep.subr.mxu0 0.0
  %302 = vmatpush1.msra.mxu0 0.0
  %303 = vmatprep.subr.mxu0 0.0
  %304 = vmatpush1.msra.mxu0 0.0
  %305 = vmatprep.subr.mxu0 0.0
  %306 = vmatpush1.msra.mxu0 0.0
  %307 = vmatprep.subr.mxu0 0.0
  %308 = vmatpush1.msra.mxu0 0.0
  %309 = vmatprep.subr.mxu0 0.0
  %310 = vmatpush1.msra.mxu0 0.0
  %311 = vmatprep.subr.mxu0 0.0
  %312 = vmatpush1.msra.mxu0 0.0
  %313 = vmatprep.subr.mxu0 0.0
  %314 = vmatpush1.msra.mxu0 0.0
  %315 = vmatprep.subr.mxu0 0.0
  %316 = vmatpush1.msra.mxu0 0.0
  %317 = vmatprep.subr.mxu0 0.0
  %318 = vmatpush1.msra.mxu0 0.0
  %319 = vmatprep.subr.mxu0 0.0
  %320 = vmatpush1.msra.mxu0 0.0
  %321 = vmatprep.subr.mxu0 0.0
  %322 = vmatpush1.msra.mxu0 0.0
  %323 = vmatprep.subr.mxu0 0.0
  %324 = vmatpush1.msra.mxu0 0.0
  %325 = vmatprep.subr.mxu0 0.0
  %326 = vmatpush1.msra.mxu0 0.0
  %327 = vmatprep.subr.mxu0 0.0
  %328 = vmatpush1.msra.mxu0 0.0
  %329 = vmatprep.subr.mxu0 0.0
  %330 = vmatpush1.msra.mxu0 0.0
  %331 = vmatprep.subr.mxu0 0.0
  %332 = vmatpush1.msra.mxu0 0.0
  %333 = vmatprep.subr.mxu0 0.0
  %334 = vmatpush1.msra.mxu0 0.0
  %335 = vmatprep.subr.mxu0 0.0
  %336 = vmatpush1.msra.mxu0 0.0
  %337 = vmatprep.subr.mxu0 0.0
  %338 = vmatpush1.msra.mxu0 0.0
  %339 = vmatprep.mubr.f32.mxu0 0.0
  %340 = vmatmul.mubr.f32.gmra.mrb[0].mxu0 %v273
  %v341 = vpop.f32.mrb[0].mxu0
  %v342 = vadd.f32 0.0, %v341
  %v343 = vpop.f32.mrb[0].mxu0
  %344 = vdwg.mxu0
  %v346 = vsel %vm271, %v199, 0
  %348 = vmatprep.subr.mxu0 0.0
  %349 = vmatpush1.msra.mxu0 %v41
  %350 = vmatprep.subr.mxu0 0.0
  %351 = vmatpush1.msra.mxu0 %v42
  %352 = vmatprep.subr.mxu0 0.0
  %353 = vmatpush1.msra.mxu0 %v43
  %354 = vmatprep.subr.mxu0 0.0
  %355 = vmatpush1.msra.mxu0 %v44
  %356 = vmatprep.subr.mxu0 0.0
  %357 = vmatpush1.msra.mxu0 0.0
  %358 = vmatprep.subr.mxu0 0.0
  %359 = vmatpush1.msra.mxu0 0.0
  %360 = vmatprep.subr.mxu0 0.0
  %361 = vmatpush1.msra.mxu0 0.0
  %362 = vmatprep.subr.mxu0 0.0
  %363 = vmatpush1.msra.mxu0 0.0
  %364 = vmatprep.subr.mxu0 0.0
  %365 = vmatpush1.msra.mxu0 0.0
  %366 = vmatprep.subr.mxu0 0.0
  %367 = vmatpush1.msra.mxu0 0.0
  %368 = vmatprep.subr.mxu0 0.0
  %369 = vmatpush1.msra.mxu0 0.0
  %370 = vmatprep.subr.mxu0 0.0
  %371 = vmatpush1.msra.mxu0 0.0
  %372 = vmatprep.subr.mxu0 0.0
  %373 = vmatpush1.msra.mxu0 0.0
  %374 = vmatprep.subr.mxu0 0.0
  %375 = vmatpush1.msra.mxu0 0.0
  %376 = vmatprep.subr.mxu0 0.0
  %377 = vmatpush1.msra.mxu0 0.0
  %378 = vmatprep.subr.mxu0 0.0
  %379 = vmatpush1.msra.mxu0 0.0
  %380 = vmatprep.subr.mxu0 0.0
  %381 = vmatpush1.msra.mxu0 0.0
  %382 = vmatprep.subr.mxu0 0.0
  %383 = vmatpush1.msra.mxu0 0.0
  %384 = vmatprep.subr.mxu0 0.0
  %385 = vmatpush1.msra.mxu0 0.0
  %386 = vmatprep.subr.mxu0 0.0
  %387 = vmatpush1.msra.mxu0 0.0
  %388 = vmatprep.subr.mxu0 0.0
  %389 = vmatpush1.msra.mxu0 0.0
  %390 = vmatprep.subr.mxu0 0.0
  %391 = vmatpush1.msra.mxu0 0.0
  %392 = vmatprep.subr.mxu0 0.0
  %393 = vmatpush1.msra.mxu0 0.0
  %394 = vmatprep.subr.mxu0 0.0
  %395 = vmatpush1.msra.mxu0 0.0
  %396 = vmatprep.subr.mxu0 0.0
  %397 = vmatpush1.msra.mxu0 0.0
  %398 = vmatprep.subr.mxu0 0.0
  %399 = vmatpush1.msra.mxu0 0.0
  %400 = vmatprep.subr.mxu0 0.0
  %401 = vmatpush1.msra.mxu0 0.0
  %402 = vmatprep.subr.mxu0 0.0
  %403 = vmatpush1.msra.mxu0 0.0
  %404 = vmatprep.subr.mxu0 0.0
  %405 = vmatpush1.msra.mxu0 0.0
  %406 = vmatprep.subr.mxu0 0.0
  %407 = vmatpush1.msra.mxu0 0.0
  %408 = vmatprep.subr.mxu0 0.0
  %409 = vmatpush1.msra.mxu0 0.0
  %410 = vmatprep.subr.mxu0 0.0
  %411 = vmatpush1.msra.mxu0 0.0
  %412 = vmatprep.mubr.f32.mxu0 0.0
  %413 = vmatmul.mubr.f32.gmra.mrb[0].mxu0 %v346
  %v414 = vpop.f32.mrb[0].mxu0
  %v415 = vadd.f32 0.0, %v414
  %v416 = vpop.f32.mrb[0].mxu0
  %417 = vdwg.mxu0
  %v419 = vsel %vm271, %v270, 0
  %421 = vmatprep.subr.mxu0 0.0
  %422 = vmatpush1.msra.mxu0 %v47
  %423 = vmatprep.subr.mxu0 0.0
  %424 = vmatpush1.msra.mxu0 %v48
  %425 = vmatprep.subr.mxu0 0.0
  %426 = vmatpush1.msra.mxu0 %v49
  %427 = vmatprep.subr.mxu0 0.0
  %428 = vmatpush1.msra.mxu0 %v50
  %429 = vmatprep.subr.mxu0 0.0
  %430 = vmatpush1.msra.mxu0 0.0
  %431 = vmatprep.subr.mxu0 0.0
  %432 = vmatpush1.msra.mxu0 0.0
  %433 = vmatprep.subr.mxu0 0.0
  %434 = vmatpush1.msra.mxu0 0.0
  %435 = vmatprep.subr.mxu0 0.0
  %436 = vmatpush1.msra.mxu0 0.0
  %437 = vmatprep.subr.mxu0 0.0
  %438 = vmatpush1.msra.mxu0 0.0
  %439 = vmatprep.subr.mxu0 0.0
  %440 = vmatpush1.msra.mxu0 0.0
  %441 = vmatprep.subr.mxu0 0.0
  %442 = vmatpush1.msra.mxu0 0.0
  %443 = vmatprep.subr.mxu0 0.0
  %444 = vmatpush1.msra.mxu0 0.0
  %445 = vmatprep.subr.mxu0 0.0
  %446 = vmatpush1.msra.mxu0 0.0
  %447 = vmatprep.subr.mxu0 0.0
  %448 = vmatpush1.msra.mxu0 0.0
  %449 = vmatprep.subr.mxu0 0.0
  %450 = vmatpush1.msra.mxu0 0.0
  %451 = vmatprep.subr.mxu0 0.0
  %452 = vmatpush1.msra.mxu0 0.0
  %453 = vmatprep.subr.mxu0 0.0
  %454 = vmatpush1.msra.mxu0 0.0
  %455 = vmatprep.subr.mxu0 0.0
  %456 = vmatpush1.msra.mxu0 0.0
  %457 = vmatprep.subr.mxu0 0.0
  %458 = vmatpush1.msra.mxu0 0.0
  %459 = vmatprep.subr.mxu0 0.0
  %460 = vmatpush1.msra.mxu0 0.0
  %461 = vmatprep.subr.mxu0 0.0
  %462 = vmatpush1.msra.mxu0 0.0
  %463 = vmatprep.subr.mxu0 0.0
  %464 = vmatpush1.msra.mxu0 0.0
  %465 = vmatprep.subr.mxu0 0.0
  %466 = vmatpush1.msra.mxu0 0.0
  %467 = vmatprep.subr.mxu0 0.0
  %468 = vmatpush1.msra.mxu0 0.0
  %469 = vmatprep.subr.mxu0 0.0
  %470 = vmatpush1.msra.mxu0 0.0
  %471 = vmatprep.subr.mxu0 0.0
  %472 = vmatpush1.msra.mxu0 0.0
  %473 = vmatprep.subr.mxu0 0.0
  %474 = vmatpush1.msra.mxu0 0.0
  %475 = vmatprep.subr.mxu0 0.0
  %476 = vmatpush1.msra.mxu0 0.0
  %477 = vmatprep.subr.mxu0 0.0
  %478 = vmatpush1.msra.mxu0 0.0
  %479 = vmatprep.subr.mxu0 0.0
  %480 = vmatpush1.msra.mxu0 0.0
  %481 = vmatprep.subr.mxu0 0.0
  %482 = vmatpush1.msra.mxu0 0.0
  %483 = vmatprep.subr.mxu0 0.0
  %484 = vmatpush1.msra.mxu0 0.0
  %485 = vmatprep.mubr.f32.mxu0 0.0
  %486 = vmatmul.mubr.f32.gmra.mrb[0].mxu0 %v419
  %v487 = vpop.f32.mrb[0].mxu0
  %v488 = vadd.f32 0.0, %v487
  %v489 = vpop.f32.mrb[0].mxu0
  %490 = vdwg.mxu0
  %v491 = vld [vmem:[%s2] sm:$0xff]
  %v492 = vmul.f32 %v342, 0.5
  %v493 = vmul.f32 %v492, 1.442695
  %v494 = vpow.pop %v493
  %496 = vrot.lane.b32.xlu0 %v494, 120
  %v497 = vpop.permute.xlu0 %496
  %v499 = vmul.f32 %v491, %v497
  %v500 = vadd.f32 %v342, %v499
  %v501 = vmul.f32 %v488, 0.5
  %v502 = vmul.f32 %v501, 1.442695
  %v503 = vpow.pop %v502
  %v504 = vmul.f32 %v491, %v503
  %506 = vrot.lane.b32.xlu0 %v504, 120
  %v507 = vpop.permute.xlu0 %506
  %v509 = vadd.f32 %v488, %v507
  %v510 = vmul.f32 %v415, 0.5
  %v511 = vmul.f32 %v510, 1.442695
  %v512 = vpow.pop %v511
  %514 = vrot.lane.b32.xlu0 %v512, 8
  %v515 = vpop.permute.xlu0 %514
  %v517 = vmul.f32 %v491, %v515
  %519 = vrot.lane.b32.xlu0 %v517, 112
  %v520 = vpop.permute.xlu0 %519
  %v522 = vadd.f32 %v415, %v520
  %v523 = vld [vmem:[%s7] sm:$0xff]
  %v524 = vld [vmem:[%s8] sm:$0xff]
  %v525 = vld [vmem:[%s9] sm:$0xff]
  %v526 = vld [vmem:[%s9 + $0x8] sm:$0xff]
  %v527 = vld [vmem:[%s9 + $0x10] sm:$0xff]
  %v528 = vld [vmem:[%s9 + $0x18] sm:$0xff]
  %vm529 = vcmask 64512
  %v531 = vsel %vm529, %v509, 0
  %533 = vmatprep.subr.mxu0 0.0
  %534 = vmatpush1.msra.mxu0 %v524
  %535 = vmatprep.subr.mxu0 0.0
  %536 = vmatpush1.msra.mxu0 0.0
  %537 = vmatprep.subr.mxu0 0.0
  %538 = vmatpush1.msra.mxu0 0.0
  %539 = vmatprep.subr.mxu0 0.0
  %540 = vmatpush1.msra.mxu0 0.0
  %541 = vmatprep.subr.mxu0 0.0
  %542 = vmatpush1.msra.mxu0 0.0
  %543 = vmatprep.subr.mxu0 0.0
  %544 = vmatpush1.msra.mxu0 0.0
  %545 = vmatprep.subr.mxu0 0.0
  %546 = vmatpush1.msra.mxu0 0.0
  %547 = vmatprep.subr.mxu0 0.0
  %548 = vmatpush1.msra.mxu0 0.0
  %549 = vmatprep.subr.mxu0 0.0
  %550 = vmatpush1.msra.mxu0 0.0
  %551 = vmatprep.subr.mxu0 0.0
  %552 = vmatpush1.msra.mxu0 0.0
  %553 = vmatprep.subr.mxu0 0.0
  %554 = vmatpush1.msra.mxu0 0.0
  %555 = vmatprep.subr.mxu0 0.0
  %556 = vmatpush1.msra.mxu0 0.0
  %557 = vmatprep.subr.mxu0 0.0
  %558 = vmatpush1.msra.mxu0 0.0
  %559 = vmatprep.subr.mxu0 0.0
  %560 = vmatpush1.msra.mxu0 0.0
  %561 = vmatprep.subr.mxu0 0.0
  %562 = vmatpush1.msra.mxu0 0.0
  %563 = vmatprep.subr.mxu0 0.0
  %564 = vmatpush1.msra.mxu0 0.0
  %565 = vmatprep.subr.mxu0 0.0
  %566 = vmatpush1.msra.mxu0 0.0
  %567 = vmatprep.subr.mxu0 0.0
  %568 = vmatpush1.msra.mxu0 0.0
  %569 = vmatprep.subr.mxu0 0.0
  %570 = vmatpush1.msra.mxu0 0.0
  %571 = vmatprep.subr.mxu0 0.0
  %572 = vmatpush1.msra.mxu0 0.0
  %573 = vmatprep.subr.mxu0 0.0
  %574 = vmatpush1.msra.mxu0 0.0
  %575 = vmatprep.subr.mxu0 0.0
  %576 = vmatpush1.msra.mxu0 0.0
  %577 = vmatprep.subr.mxu0 0.0
  %578 = vmatpush1.msra.mxu0 0.0
  %579 = vmatprep.subr.mxu0 0.0
  %580 = vmatpush1.msra.mxu0 0.0
  %581 = vmatprep.subr.mxu0 0.0
  %582 = vmatpush1.msra.mxu0 0.0
  %583 = vmatprep.subr.mxu0 0.0
  %584 = vmatpush1.msra.mxu0 0.0
  %585 = vmatprep.subr.mxu0 0.0
  %586 = vmatpush1.msra.mxu0 0.0
  %587 = vmatprep.subr.mxu0 0.0
  %588 = vmatpush1.msra.mxu0 0.0
  %589 = vmatprep.subr.mxu0 0.0
  %590 = vmatpush1.msra.mxu0 0.0
  %591 = vmatprep.subr.mxu0 0.0
  %592 = vmatpush1.msra.mxu0 0.0
  %593 = vmatprep.subr.mxu0 0.0
  %594 = vmatpush1.msra.mxu0 0.0
  %595 = vmatprep.subr.mxu0 0.0
  %596 = vmatpush1.msra.mxu0 0.0
  %597 = vmatprep.mubr.f32.mxu0 0.0
  %598 = vmatmul.mubr.f32.gmra.mrb[0].mxu0 %v531
  %v599 = vpop.f32.mrb[0].mxu0
  %v600 = vadd.f32 0.0, %v599
  %v601 = vpop.f32.mrb[0].mxu0
  %602 = vdwg.mxu0
  %v604 = vsel %vm529, %v522, 0
  %606 = vmatprep.subr.mxu0 0.0
  %607 = vmatpush1.msra.mxu0 %v523
  %608 = vmatprep.subr.mxu0 0.0
  %609 = vmatpush1.msra.mxu0 0.0
  %610 = vmatprep.subr.mxu0 0.0
  %611 = vmatpush1.msra.mxu0 0.0
  %612 = vmatprep.subr.mxu0 0.0
  %613 = vmatpush1.msra.mxu0 0.0
  %614 = vmatprep.subr.mxu0 0.0
  %615 = vmatpush1.msra.mxu0 0.0
  %616 = vmatprep.subr.mxu0 0.0
  %617 = vmatpush1.msra.mxu0 0.0
  %618 = vmatprep.subr.mxu0 0.0
  %619 = vmatpush1.msra.mxu0 0.0
  %620 = vmatprep.subr.mxu0 0.0
  %621 = vmatpush1.msra.mxu0 0.0
  %622 = vmatprep.subr.mxu0 0.0
  %623 = vmatpush1.msra.mxu0 0.0
  %624 = vmatprep.subr.mxu0 0.0
  %625 = vmatpush1.msra.mxu0 0.0
  %626 = vmatprep.subr.mxu0 0.0
  %627 = vmatpush1.msra.mxu0 0.0
  %628 = vmatprep.subr.mxu0 0.0
  %629 = vmatpush1.msra.mxu0 0.0
  %630 = vmatprep.subr.mxu0 0.0
  %631 = vmatpush1.msra.mxu0 0.0
  %632 = vmatprep.subr.mxu0 0.0
  %633 = vmatpush1.msra.mxu0 0.0
  %634 = vmatprep.subr.mxu0 0.0
  %635 = vmatpush1.msra.mxu0 0.0
  %636 = vmatprep.subr.mxu0 0.0
  %637 = vmatpush1.msra.mxu0 0.0
  %638 = vmatprep.subr.mxu0 0.0
  %639 = vmatpush1.msra.mxu0 0.0
  %640 = vmatprep.subr.mxu0 0.0
  %641 = vmatpush1.msra.mxu0 0.0
  %642 = vmatprep.subr.mxu0 0.0
  %643 = vmatpush1.msra.mxu0 0.0
  %644 = vmatprep.subr.mxu0 0.0
  %645 = vmatpush1.msra.mxu0 0.0
  %646 = vmatprep.subr.mxu0 0.0
  %647 = vmatpush1.msra.mxu0 0.0
  %648 = vmatprep.subr.mxu0 0.0
  %649 = vmatpush1.msra.mxu0 0.0
  %650 = vmatprep.subr.mxu0 0.0
  %651 = vmatpush1.msra.mxu0 0.0
  %652 = vmatprep.subr.mxu0 0.0
  %653 = vmatpush1.msra.mxu0 0.0
  %654 = vmatprep.subr.mxu0 0.0
  %655 = vmatpush1.msra.mxu0 0.0
  %656 = vmatprep.subr.mxu0 0.0
  %657 = vmatpush1.msra.mxu0 0.0
  %658 = vmatprep.subr.mxu0 0.0
  %659 = vmatpush1.msra.mxu0 0.0
  %660 = vmatprep.subr.mxu0 0.0
  %661 = vmatpush1.msra.mxu0 0.0
  %662 = vmatprep.subr.mxu0 0.0
  %663 = vmatpush1.msra.mxu0 0.0
  %664 = vmatprep.subr.mxu0 0.0
  %665 = vmatpush1.msra.mxu0 0.0
  %666 = vmatprep.subr.mxu0 0.0
  %667 = vmatpush1.msra.mxu0 0.0
  %668 = vmatprep.subr.mxu0 0.0
  %669 = vmatpush1.msra.mxu0 0.0
  %670 = vmatprep.mubr.f32.mxu0 0.0
  %671 = vmatmul.mubr.f32.gmra.mrb[0].mxu0 %v604
  %v672 = vpop.f32.mrb[0].mxu0
  %v673 = vadd.f32 0.0, %v672
  %v674 = vpop.f32.mrb[0].mxu0
  %675 = vdwg.mxu0
  %v677 = vsel %vm529, %v500, 0
  %679 = vmatprep.subr.mxu0 0.0
  %680 = vmatpush1.msra.mxu0 %v523
  %681 = vmatprep.subr.mxu0 0.0
  %682 = vmatpush1.msra.mxu0 0.0
  %683 = vmatprep.subr.mxu0 0.0
  %684 = vmatpush1.msra.mxu0 0.0
  %685 = vmatprep.subr.mxu0 0.0
  %686 = vmatpush1.msra.mxu0 0.0
  %687 = vmatprep.subr.mxu0 0.0
  %688 = vmatpush1.msra.mxu0 0.0
  %689 = vmatprep.subr.mxu0 0.0
  %690 = vmatpush1.msra.mxu0 0.0
  %691 = vmatprep.subr.mxu0 0.0
  %692 = vmatpush1.msra.mxu0 0.0
  %693 = vmatprep.subr.mxu0 0.0
  %694 = vmatpush1.msra.mxu0 0.0
  %695 = vmatprep.subr.mxu0 0.0
  %696 = vmatpush1.msra.mxu0 0.0
  %697 = vmatprep.subr.mxu0 0.0
  %698 = vmatpush1.msra.mxu0 0.0
  %699 = vmatprep.subr.mxu0 0.0
  %700 = vmatpush1.msra.mxu0 0.0
  %701 = vmatprep.subr.mxu0 0.0
  %702 = vmatpush1.msra.mxu0 0.0
  %703 = vmatprep.subr.mxu0 0.0
  %704 = vmatpush1.msra.mxu0 0.0
  %705 = vmatprep.subr.mxu0 0.0
  %706 = vmatpush1.msra.mxu0 0.0
  %707 = vmatprep.subr.mxu0 0.0
  %708 = vmatpush1.msra.mxu0 0.0
  %709 = vmatprep.subr.mxu0 0.0
  %710 = vmatpush1.msra.mxu0 0.0
  %711 = vmatprep.subr.mxu0 0.0
  %712 = vmatpush1.msra.mxu0 0.0
  %713 = vmatprep.subr.mxu0 0.0
  %714 = vmatpush1.msra.mxu0 0.0
  %715 = vmatprep.subr.mxu0 0.0
  %716 = vmatpush1.msra.mxu0 0.0
  %717 = vmatprep.subr.mxu0 0.0
  %718 = vmatpush1.msra.mxu0 0.0
  %719 = vmatprep.subr.mxu0 0.0
  %720 = vmatpush1.msra.mxu0 0.0
  %721 = vmatprep.subr.mxu0 0.0
  %722 = vmatpush1.msra.mxu0 0.0
  %723 = vmatprep.subr.mxu0 0.0
  %724 = vmatpush1.msra.mxu0 0.0
  %725 = vmatprep.subr.mxu0 0.0
  %726 = vmatpush1.msra.mxu0 0.0
  %727 = vmatprep.subr.mxu0 0.0
  %728 = vmatpush1.msra.mxu0 0.0
  %729 = vmatprep.subr.mxu0 0.0
  %730 = vmatpush1.msra.mxu0 0.0
  %731 = vmatprep.subr.mxu0 0.0
  %732 = vmatpush1.msra.mxu0 0.0
  %733 = vmatprep.subr.mxu0 0.0
  %734 = vmatpush1.msra.mxu0 0.0
  %735 = vmatprep.subr.mxu0 0.0
  %736 = vmatpush1.msra.mxu0 0.0
  %737 = vmatprep.subr.mxu0 0.0
  %738 = vmatpush1.msra.mxu0 0.0
  %739 = vmatprep.subr.mxu0 0.0
  %740 = vmatpush1.msra.mxu0 0.0
  %741 = vmatprep.subr.mxu0 0.0
  %742 = vmatpush1.msra.mxu0 0.0
  %743 = vmatprep.mubr.f32.mxu0 0.0
  %744 = vmatmul.mubr.f32.gmra.mrb[0].mxu0 %v677
  %v745 = vpop.f32.mrb[0].mxu0
  %v746 = vadd.f32 %v600, %v745
  %v747 = vpop.f32.mrb[0].mxu0
  %748 = vdwg.mxu0
  %v749 = vmax.f32 %v746, 0.0
  %v750 = vmax.f32 %v673, 0.0
  %v751 = vmax.f32 %v600, 0.0
  %v753 = vsel %vm271, %v749, 0
  %755 = vmatprep.subr.mxu0 0.0
  %756 = vmatpush1.msra.mxu0 %v525
  %757 = vmatprep.subr.mxu0 0.0
  %758 = vmatpush1.msra.mxu0 %v526
  %759 = vmatprep.subr.mxu0 0.0
  %760 = vmatpush1.msra.mxu0 %v527
  %761 = vmatprep.subr.mxu0 0.0
  %762 = vmatpush1.msra.mxu0 %v528
  %763 = vmatprep.subr.mxu0 0.0
  %764 = vmatpush1.msra.mxu0 0.0
  %765 = vmatprep.subr.mxu0 0.0
  %766 = vmatpush1.msra.mxu0 0.0
  %767 = vmatprep.subr.mxu0 0.0
  %768 = vmatpush1.msra.mxu0 0.0
  %769 = vmatprep.subr.mxu0 0.0
  %770 = vmatpush1.msra.mxu0 0.0
  %771 = vmatprep.subr.mxu0 0.0
  %772 = vmatpush1.msra.mxu0 0.0
  %773 = vmatprep.subr.mxu0 0.0
  %774 = vmatpush1.msra.mxu0 0.0
  %775 = vmatprep.subr.mxu0 0.0
  %776 = vmatpush1.msra.mxu0 0.0
  %777 = vmatprep.subr.mxu0 0.0
  %778 = vmatpush1.msra.mxu0 0.0
  %779 = vmatprep.subr.mxu0 0.0
  %780 = vmatpush1.msra.mxu0 0.0
  %781 = vmatprep.subr.mxu0 0.0
  %782 = vmatpush1.msra.mxu0 0.0
  %783 = vmatprep.subr.mxu0 0.0
  %784 = vmatpush1.msra.mxu0 0.0
  %785 = vmatprep.subr.mxu0 0.0
  %786 = vmatpush1.msra.mxu0 0.0
  %787 = vmatprep.subr.mxu0 0.0
  %788 = vmatpush1.msra.mxu0 0.0
  %789 = vmatprep.subr.mxu0 0.0
  %790 = vmatpush1.msra.mxu0 0.0
  %791 = vmatprep.subr.mxu0 0.0
  %792 = vmatpush1.msra.mxu0 0.0
  %793 = vmatprep.subr.mxu0 0.0
  %794 = vmatpush1.msra.mxu0 0.0
  %795 = vmatprep.subr.mxu0 0.0
  %796 = vmatpush1.msra.mxu0 0.0
  %797 = vmatprep.subr.mxu0 0.0
  %798 = vmatpush1.msra.mxu0 0.0
  %799 = vmatprep.subr.mxu0 0.0
  %800 = vmatpush1.msra.mxu0 0.0
  %801 = vmatprep.subr.mxu0 0.0
  %802 = vmatpush1.msra.mxu0 0.0
  %803 = vmatprep.subr.mxu0 0.0
  %804 = vmatpush1.msra.mxu0 0.0
  %805 = vmatprep.subr.mxu0 0.0
  %806 = vmatpush1.msra.mxu0 0.0
  %807 = vmatprep.subr.mxu0 0.0
  %808 = vmatpush1.msra.mxu0 0.0
  %809 = vmatprep.subr.mxu0 0.0
  %810 = vmatpush1.msra.mxu0 0.0
  %811 = vmatprep.subr.mxu0 0.0
  %812 = vmatpush1.msra.mxu0 0.0
  %813 = vmatprep.subr.mxu0 0.0
  %814 = vmatpush1.msra.mxu0 0.0
  %815 = vmatprep.subr.mxu0 0.0
  %816 = vmatpush1.msra.mxu0 0.0
  %817 = vmatprep.subr.mxu0 0.0
  %818 = vmatpush1.msra.mxu0 0.0
  %819 = vmatprep.mubr.f32.mxu0 0.0
  %820 = vmatmul.mubr.f32.gmra.mrb[0].mxu0 %v753
  %v821 = vpop.f32.mrb[0].mxu0
  %v822 = vadd.f32 0.0, %v821
  %v823 = vpop.f32.mrb[0].mxu0
  %824 = vdwg.mxu0
  %v826 = vsel %vm271, %v750, 0
  %828 = vmatprep.subr.mxu0 0.0
  %829 = vmatpush1.msra.mxu0 %v525
  %830 = vmatprep.subr.mxu0 0.0
  %831 = vmatpush1.msra.mxu0 %v526
  %832 = vmatprep.subr.mxu0 0.0
  %833 = vmatpush1.msra.mxu0 %v527
  %834 = vmatprep.subr.mxu0 0.0
  %835 = vmatpush1.msra.mxu0 %v528
  %836 = vmatprep.subr.mxu0 0.0
  %837 = vmatpush1.msra.mxu0 0.0
  %838 = vmatprep.subr.mxu0 0.0
  %839 = vmatpush1.msra.mxu0 0.0
  %840 = vmatprep.subr.mxu0 0.0
  %841 = vmatpush1.msra.mxu0 0.0
  %842 = vmatprep.subr.mxu0 0.0
  %843 = vmatpush1.msra.mxu0 0.0
  %844 = vmatprep.subr.mxu0 0.0
  %845 = vmatpush1.msra.mxu0 0.0
  %846 = vmatprep.subr.mxu0 0.0
  %847 = vmatpush1.msra.mxu0 0.0
  %848 = vmatprep.subr.mxu0 0.0
  %849 = vmatpush1.msra.mxu0 0.0
  %850 = vmatprep.subr.mxu0 0.0
  %851 = vmatpush1.msra.mxu0 0.0
  %852 = vmatprep.subr.mxu0 0.0
  %853 = vmatpush1.msra.mxu0 0.0
  %854 = vmatprep.subr.mxu0 0.0
  %855 = vmatpush1.msra.mxu0 0.0
  %856 = vmatprep.subr.mxu0 0.0
  %857 = vmatpush1.msra.mxu0 0.0
  %858 = vmatprep.subr.mxu0 0.0
  %859 = vmatpush1.msra.mxu0 0.0
  %860 = vmatprep.subr.mxu0 0.0
  %861 = vmatpush1.msra.mxu0 0.0
  %862 = vmatprep.subr.mxu0 0.0
  %863 = vmatpush1.msra.mxu0 0.0
  %864 = vmatprep.subr.mxu0 0.0
  %865 = vmatpush1.msra.mxu0 0.0
  %866 = vmatprep.subr.mxu0 0.0
  %867 = vmatpush1.msra.mxu0 0.0
  %868 = vmatprep.subr.mxu0 0.0
  %869 = vmatpush1.msra.mxu0 0.0
  %870 = vmatprep.subr.mxu0 0.0
  %871 = vmatpush1.msra.mxu0 0.0
  %872 = vmatprep.subr.mxu0 0.0
  %873 = vmatpush1.msra.mxu0 0.0
  %874 = vmatprep.subr.mxu0 0.0
  %875 = vmatpush1.msra.mxu0 0.0
  %876 = vmatprep.subr.mxu0 0.0
  %877 = vmatpush1.msra.mxu0 0.0
  %878 = vmatprep.subr.mxu0 0.0
  %879 = vmatpush1.msra.mxu0 0.0
  %880 = vmatprep.subr.mxu0 0.0
  %881 = vmatpush1.msra.mxu0 0.0
  %882 = vmatprep.subr.mxu0 0.0
  %883 = vmatpush1.msra.mxu0 0.0
  %884 = vmatprep.subr.mxu0 0.0
  %885 = vmatpush1.msra.mxu0 0.0
  %886 = vmatprep.subr.mxu0 0.0
  %887 = vmatpush1.msra.mxu0 0.0
  %888 = vmatprep.subr.mxu0 0.0
  %889 = vmatpush1.msra.mxu0 0.0
  %890 = vmatprep.subr.mxu0 0.0
  %891 = vmatpush1.msra.mxu0 0.0
  %892 = vmatprep.mubr.f32.mxu0 0.0
  %893 = vmatmul.mubr.f32.gmra.mrb[0].mxu0 %v826
  %v894 = vpop.f32.mrb[0].mxu0
  %v895 = vadd.f32 0.0, %v894
  %v896 = vpop.f32.mrb[0].mxu0
  %897 = vdwg.mxu0
  %v899 = vsel %vm271, %v751, 0
  %901 = vmatprep.subr.mxu0 0.0
  %902 = vmatpush1.msra.mxu0 %v525
  %903 = vmatprep.subr.mxu0 0.0
  %904 = vmatpush1.msra.mxu0 %v526
  %905 = vmatprep.subr.mxu0 0.0
  %906 = vmatpush1.msra.mxu0 %v527
  %907 = vmatprep.subr.mxu0 0.0
  %908 = vmatpush1.msra.mxu0 %v528
  %909 = vmatprep.subr.mxu0 0.0
  %910 = vmatpush1.msra.mxu0 0.0
  %911 = vmatprep.subr.mxu0 0.0
  %912 = vmatpush1.msra.mxu0 0.0
  %913 = vmatprep.subr.mxu0 0.0
  %914 = vmatpush1.msra.mxu0 0.0
  %915 = vmatprep.subr.mxu0 0.0
  %916 = vmatpush1.msra.mxu0 0.0
  %917 = vmatprep.subr.mxu0 0.0
  %918 = vmatpush1.msra.mxu0 0.0
  %919 = vmatprep.subr.mxu0 0.0
  %920 = vmatpush1.msra.mxu0 0.0
  %921 = vmatprep.subr.mxu0 0.0
  %922 = vmatpush1.msra.mxu0 0.0
  %923 = vmatprep.subr.mxu0 0.0
  %924 = vmatpush1.msra.mxu0 0.0
  %925 = vmatprep.subr.mxu0 0.0
  %926 = vmatpush1.msra.mxu0 0.0
  %927 = vmatprep.subr.mxu0 0.0
  %928 = vmatpush1.msra.mxu0 0.0
  %929 = vmatprep.subr.mxu0 0.0
  %930 = vmatpush1.msra.mxu0 0.0
  %931 = vmatprep.subr.mxu0 0.0
  %932 = vmatpush1.msra.mxu0 0.0
  %933 = vmatprep.subr.mxu0 0.0
  %934 = vmatpush1.msra.mxu0 0.0
  %935 = vmatprep.subr.mxu0 0.0
  %936 = vmatpush1.msra.mxu0 0.0
  %937 = vmatprep.subr.mxu0 0.0
  %938 = vmatpush1.msra.mxu0 0.0
  %939 = vmatprep.subr.mxu0 0.0
  %940 = vmatpush1.msra.mxu0 0.0
  %941 = vmatprep.subr.mxu0 0.0
  %942 = vmatpush1.msra.mxu0 0.0
  %943 = vmatprep.subr.mxu0 0.0
  %944 = vmatpush1.msra.mxu0 0.0
  %945 = vmatprep.subr.mxu0 0.0
  %946 = vmatpush1.msra.mxu0 0.0
  %947 = vmatprep.subr.mxu0 0.0
  %948 = vmatpush1.msra.mxu0 0.0
  %949 = vmatprep.subr.mxu0 0.0
  %950 = vmatpush1.msra.mxu0 0.0
  %951 = vmatprep.subr.mxu0 0.0
  %952 = vmatpush1.msra.mxu0 0.0
  %953 = vmatprep.subr.mxu0 0.0
  %954 = vmatpush1.msra.mxu0 0.0
  %955 = vmatprep.subr.mxu0 0.0
  %956 = vmatpush1.msra.mxu0 0.0
  %957 = vmatprep.subr.mxu0 0.0
  %958 = vmatpush1.msra.mxu0 0.0
  %959 = vmatprep.subr.mxu0 0.0
  %960 = vmatpush1.msra.mxu0 0.0
  %961 = vmatprep.subr.mxu0 0.0
  %962 = vmatpush1.msra.mxu0 0.0
  %963 = vmatprep.subr.mxu0 0.0
  %964 = vmatpush1.msra.mxu0 0.0
  %965 = vmatprep.mubr.f32.mxu0 0.0
  %966 = vmatmul.mubr.f32.gmra.mrb[0].mxu0 %v899
  %v967 = vpop.f32.mrb[0].mxu0
  %v968 = vadd.f32 0.0, %v967
  %v969 = vpop.f32.mrb[0].mxu0
  %970 = vdwg.mxu0
  %972 = vrot.lane.b32.xlu0 %v895, 16
  %v973 = vpop.permute.xlu0 %972
  %976 = vrot.lane.b32.xlu0 %v968, 32
  %v977 = vpop.permute.xlu0 %976
  %v979 = vsel %vm51, %v822, %v973
  %v980 = vsel %vm271, %v979, %v977
  %vm981 = vcmask 392192
  %982 = vst.msk [vmem:[%s10] sm:$0xff] %vm981, %v980
  %984 = vrot.lane.b32.xlu0 %v342, 8
  %v985 = vpop.permute.xlu0 %984
  %987 = vrot.lane.b32.xlu0 %v509, 24
  %v988 = vpop.permute.xlu0 %987
  %991 = vrot.lane.b32.xlu0 %v488, 32
  %v992 = vpop.permute.xlu0 %991
  %994 = vrot.lane.b32.xlu0 %v522, 48
  %v995 = vpop.permute.xlu0 %994
  %998 = vrot.lane.b32.xlu0 %v415, 56
  %v999 = vpop.permute.xlu0 %998
  %v1001 = vsel %vm529, %v500, %v985
  %v1002 = vsel %vm51, %v1001, %v985
  %vm1003 = vcmask 195584
  %v1004 = vsel %vm1003, %v1002, %v988
  %v1005 = vsel %vm271, %v1004, %v992
  %vm1006 = vcmask 326656
  %v1007 = vsel %vm1006, %v1005, %v992
  %v1008 = vsel %vm981, %v1007, %v995
  %vm1009 = vcmask 457728
  %v1010 = vsel %vm1009, %v1008, %v999
  %vm1011 = vcmask 523264
  %v1012 = vsel %vm1011, %v1010, %v999
  %vm1013 = vcmask 588800
  %1014 = vst.msk [vmem:[%s11] sm:$0xff] %vm1013, %v1012
  // Predicated region
  $region42: #{_forward_impl.1} parent=0 // pred_check
    _
  $region43: #{_forward_impl.1} parent=0 // pred_check_branch
    %1016 = sbr.rel (0) target = $region45
  $region44: #{_forward_impl.1} parent=0 // pred_region
    _
  $region45: #{_forward_impl.1} parent=0 // pred_fallthru
    _
  // Predicated region
  $region46: #{_forward_impl.1} parent=0 // pred_check
    _
  $region47: #{_forward_impl.1} parent=0 // pred_check_branch
    %1018 = sbr.rel (0) target = $region49
  $region48: #{_forward_impl.1} parent=0 // pred_region
    _
  $region49: #{_forward_impl.1} parent=0 // pred_fallthru
    _
  // Predicated region
  $region50: #{_forward_impl.1} parent=0 // pred_check
    _
  $region51: #{_forward_impl.1} parent=0 // pred_check_branch
    %1020 = sbr.rel (0) target = $region53
  $region52: #{_forward_impl.1} parent=0 // pred_region
    _
  $region53: #{_forward_impl.1} parent=0 // pred_fallthru
    _
  // Predicated region
  $region54: #{_forward_impl.1} parent=0 // pred_check
    _
  $region55: #{_forward_impl.1} parent=0 // pred_check_branch
    %1022 = sbr.rel (0) target = $region57
  $region56: #{_forward_impl.1} parent=0 // pred_region
    _
  $region57: #{_forward_impl.1} parent=0 // pred_fallthru
    _

</llo_original>
